<compile_context>
chip_gen: v7x
topology: tpu7x:2x2x1
jax: 0.10.0
libtpu: 0.0.40
codegen_flags: <defaults>
</compile_context>

<pallas_src>
import math
import functools

import jax
import jax.numpy as jnp
from jax.experimental import pallas as pl
from jax.experimental.pallas import tpu as pltpu

CH = 128                 # `ch` from the module
EMBED_DIM = CH * 4       # 512
_LOG10000 = math.log(10000.0)


def _round_up(x, m):
    return ((x + m - 1) // m) * m


def _bf16_silu_default():
    """bf16 EUP/VPU exists on v6e/v7x; v2-v5 must do the sigmoid in f32."""
    try:
        kind = jax.devices()[0].device_kind.lower()
    except Exception:
        return True
    return not any(s in kind for s in ("v2", "v3", "v4", "v5"))


def positional_encoding(t, dim):
    """Standard DDPM sinusoidal embedding (pure-JAX, reference only)."""
    # TODO(synk): PositionalEncoding isn't shown in the PyTorch spec; this uses the
    # standard DDPM formula with freqs exp(-log(1e4)*k/(half-1)).  Some
    # implementations divide by `half` instead — confirm against the real module.
    half = dim // 2
    freqs = jnp.exp(
        -_LOG10000 * jnp.arange(half, dtype=jnp.float32) / (half - 1)
    )
    args = t.astype(jnp.float32)[:, None] * freqs[None, :]
    return jnp.concatenate([jnp.sin(args), jnp.cos(args)], axis=-1)


def _time_embed_kernel(t_ref, freqs_ref, phase_ref, w1_ref, b1_ref, w2_ref, b2_ref,
                       out_ref, *, bf16_silu):
    # ---- fused sinusoidal positional encoding --------------------------------
    # freqs/phase are VMEM-resident (1, CH) rows; cos is sin with a pi/2 phase, so
    # a single jnp.sin over the tile replaces the previous sin+cos+select and the
    # per-row exp.  args = [TM,1] * [1,CH] + [1,CH]  (broadcast on the VPU).
    args = t_ref[...] * freqs_ref[...] + phase_ref[...]
    emb = jnp.sin(args)

    # ---- Linear(ch, 4ch) + SiLU  (bf16 weights, f32 accumulation) ------------
    h = jnp.dot(emb.astype(jnp.bfloat16), w1_ref[...],
                preferred_element_type=jnp.float32) + b1_ref[...]
    if bf16_silu:
        hb = h.astype(jnp.bfloat16)
        h_act = hb * jax.nn.sigmoid(hb)                 # bf16 EUP (v6e/v7x)
    else:
        h_act = (h * jax.nn.sigmoid(h)).astype(jnp.bfloat16)   # f32 EUP, bf16 store

    # ---- Linear(4ch, 4ch) + SiLU ----------------------------------------------
    o = jnp.dot(h_act, w2_ref[...],
                preferred_element_type=jnp.float32) + b2_ref[...]
    if bf16_silu:
        ob = o.astype(jnp.bfloat16)
        out_ref[...] = (ob * jax.nn.sigmoid(ob)).astype(out_ref.dtype)
    else:
        out_ref[...] = (o * jax.nn.sigmoid(o)).astype(out_ref.dtype)


def _pick_tm(B):
    if B < 256:
        return _round_up(B, 8)          # single grid step, 8-sublane minimum
    # Large batch: big lane-dense tiles to amortize the ~0.35us/step overhead,
    # but keep >= 2 grid steps so the "parallel" axis shards across v7x's 2 TCs.
    return min(512, _round_up(pl.cdiv(B, 2), 128))


@functools.partial(jax.jit, static_argnames=("bf16_silu", "out_dtype"))
def _time_embedding_impl(t, w1, b1, w2, b2, *, bf16_silu, out_dtype):
    B = t.shape[0]
    TM = _pick_tm(B)
    padded_B = _round_up(B, TM)

    t_f = t.astype(jnp.float32).reshape(B, 1)
    if padded_B != B:
        t_f = jnp.pad(t_f, ((0, padded_B - B), (0, 0)))

    # Constant frequency / phase rows: folded by XLA into HBM constants, tiny
    # (1 KB total) one-time DMA, VMEM-resident across grid steps.
    half = CH // 2
    f = jnp.exp((-_LOG10000 / (half - 1)) * jnp.arange(half, dtype=jnp.float32))
    freqs = jnp.concatenate([f, f]).reshape(1, CH)
    phase = jnp.concatenate(
        [jnp.zeros((half,), jnp.float32),
         jnp.full((half,), math.pi / 2, jnp.float32)]).reshape(1, CH)

    kernel = functools.partial(_time_embed_kernel, bf16_silu=bf16_silu)

    out = pl.pallas_call(
        kernel,
        out_shape=jax.ShapeDtypeStruct((padded_B, EMBED_DIM), out_dtype),
        grid=(padded_B // TM,),
        in_specs=[
            pl.BlockSpec((TM, 1), lambda i: (i, 0)),                  # timesteps
            pl.BlockSpec((1, CH), lambda i: (0, 0)),                  # freqs (resident)
            pl.BlockSpec((1, CH), lambda i: (0, 0)),                  # phase (resident)
            pl.BlockSpec((CH, EMBED_DIM), lambda i: (0, 0)),          # w1 (resident)
            pl.BlockSpec((1, EMBED_DIM), lambda i: (0, 0)),           # b1 (resident)
            pl.BlockSpec((EMBED_DIM, EMBED_DIM), lambda i: (0, 0)),   # w2 (resident)
            pl.BlockSpec((1, EMBED_DIM), lambda i: (0, 0)),           # b2 (resident)
        ],
        out_specs=pl.BlockSpec((TM, EMBED_DIM), lambda i: (i, 0)),
        compiler_params=pltpu.CompilerParams(
            dimension_semantics=("parallel",)  # megacore sharding on v7x
        ),
    )(t_f, freqs, phase, w1, b1, w2, b2)

    return out[:B]


def time_embedding(t, w1, b1, w2, b2, out_dtype=jnp.bfloat16):
    """t: int32 [B] timesteps -> [B, EMBED_DIM] in `out_dtype`.

    w1: bf16 [CH, EMBED_DIM], w2: bf16 [EMBED_DIM, EMBED_DIM],
    b1/b2: f32 [1, EMBED_DIM].  out_dtype defaults to bf16 (halves the output
    writeback, the only per-step HBM traffic at large batch); pass jnp.float32
    to match the torch module's dtype exactly.
    """
    return _time_embedding_impl(t, w1, b1, w2, b2,
                                bf16_silu=_bf16_silu_default(),
                                out_dtype=jnp.dtype(out_dtype))


def init_params(key):
    """Deterministic init mimicking nn.Linear (uniform +-1/sqrt(fan_in)), f32."""
    k1, k2, k3, k4 = jax.random.split(key, 4)
    bound1 = 1.0 / math.sqrt(CH)
    bound2 = 1.0 / math.sqrt(EMBED_DIM)
    w1 = jax.random.uniform(k1, (CH, EMBED_DIM), jnp.float32, -bound1, bound1)
    b1 = jax.random.uniform(k2, (1, EMBED_DIM), jnp.float32, -bound1, bound1)
    w2 = jax.random.uniform(k3, (EMBED_DIM, EMBED_DIM), jnp.float32, -bound2, bound2)
    b2 = jax.random.uniform(k4, (1, EMBED_DIM), jnp.float32, -bound2, bound2)
    return w1, b1, w2, b2


def reference_matched(t, w1_bf16, b1, w2_bf16, b2, bf16_silu, out_dtype):
    """Pure-JAX reference replicating the kernel's bf16 compute path."""
    emb = positional_encoding(t, CH)
    h = jnp.dot(emb.astype(jnp.bfloat16), w1_bf16,
                preferred_element_type=jnp.float32) + b1
    if bf16_silu:
        hb = h.astype(jnp.bfloat16)
        h = hb * jax.nn.sigmoid(hb)
    else:
        h = (h * jax.nn.sigmoid(h)).astype(jnp.bfloat16)
    o = jnp.dot(h, w2_bf16, preferred_element_type=jnp.float32) + b2
    if bf16_silu:
        ob = o.astype(jnp.bfloat16)
        o = ob * jax.nn.sigmoid(ob)
    else:
        o = o * jax.nn.sigmoid(o)
    return o.astype(out_dtype)


def reference_f32(t, w1, b1, w2, b2):
    """Full-precision reference (what the torch module computes in f32)."""
    emb = positional_encoding(t, CH)
    h = emb @ w1 + b1
    h = h * jax.nn.sigmoid(h)
    o = h @ w2 + b2
    return o * jax.nn.sigmoid(o)


if __name__ == "__main__":
    key = jax.random.PRNGKey(0)
    w1f, b1, w2f, b2 = init_params(key)
    w1, w2 = w1f.astype(jnp.bfloat16), w2f.astype(jnp.bfloat16)

    # Small batch of integer timesteps (module's `t` is a long tensor).
    B = 8
    t = jax.random.randint(jax.random.PRNGKey(1), (B,), 0, 1000, dtype=jnp.int32)

    out = time_embedding(t, w1, b1, w2, b2)
    out = jax.block_until_ready(out)
    assert out.shape == (B, EMBED_DIM)

    out_f32 = out.astype(jnp.float32)
    bf16_silu = _bf16_silu_default()

    # 1) Tight check against a reference that mirrors the kernel's bf16 path.
    ref_m = reference_matched(t, w1, b1, w2, b2, bf16_silu, jnp.float32)
    err_m = float(jnp.max(jnp.abs(out_f32 - ref_m)))
    assert jnp.allclose(out_f32, ref_m, atol=2e-2, rtol=2e-2), err_m

    # 2) Looser check against the true f32 module to bound bf16 precision loss.
    ref_f = reference_f32(t, w1f, b1, w2f, b2)
    err_f = float(jnp.max(jnp.abs(out_f32 - ref_f)))
    assert jnp.allclose(out_f32, ref_f, atol=6e-2, rtol=6e-2), err_f

    print("KERNEL_OK")
</pallas_src>

<mosaic_0001>
module attributes {stable_mosaic.version = 11 : i64} {
  func.func @_time_embed_kernel(%arg0: i32, %arg1: memref<8x1xf32, #tpu.memory_space<vmem>>, %arg2: memref<1x128xf32, #tpu.memory_space<vmem>>, %arg3: memref<1x128xf32, #tpu.memory_space<vmem>>, %arg4: memref<128x512xbf16, #tpu.memory_space<vmem>>, %arg5: memref<1x512xf32, #tpu.memory_space<vmem>>, %arg6: memref<512x512xbf16, #tpu.memory_space<vmem>>, %arg7: memref<1x512xf32, #tpu.memory_space<vmem>>, %arg8: memref<8x512xbf16, #tpu.memory_space<vmem>>) attributes {dimension_semantics = [#tpu.dimension_semantics<parallel>], iteration_bounds = array<i64: 1>, scalar_prefetch = 0 : i64, scratch_operands = 0 : i64, tpu.core_type = #tpu.core_type<tc>, window_params = [{transform_indices = @transform_0, window_bounds = array<i64: 8, 1>}, {pipeline_mode = #tpu.pipeline_mode<synchronous>, transform_indices = @transform_1, window_bounds = array<i64: 1, 128>}, {pipeline_mode = #tpu.pipeline_mode<synchronous>, transform_indices = @transform_2, window_bounds = array<i64: 1, 128>}, {pipeline_mode = #tpu.pipeline_mode<synchronous>, transform_indices = @transform_3, window_bounds = array<i64: 128, 512>}, {pipeline_mode = #tpu.pipeline_mode<synchronous>, transform_indices = @transform_4, window_bounds = array<i64: 1, 512>}, {pipeline_mode = #tpu.pipeline_mode<synchronous>, transform_indices = @transform_5, window_bounds = array<i64: 512, 512>}, {pipeline_mode = #tpu.pipeline_mode<synchronous>, transform_indices = @transform_6, window_bounds = array<i64: 1, 512>}, {transform_indices = @transform_7, window_bounds = array<i64: 8, 512>}]} {
    %c0 = arith.constant 0 : index
    %c0_0 = arith.constant 0 : index
    %0 = vector.load %arg1[%c0, %c0_0] : memref<8x1xf32, #tpu.memory_space<vmem>>, vector<8x1xf32>
    %c0_1 = arith.constant 0 : index
    %c0_2 = arith.constant 0 : index
    %1 = vector.load %arg2[%c0_1, %c0_2] : memref<1x128xf32, #tpu.memory_space<vmem>>, vector<1x128xf32>
    %2 = vector.broadcast %0 : vector<8x1xf32> to vector<8x128xf32>
    %3 = vector.broadcast %1 : vector<1x128xf32> to vector<8x128xf32>
    %4 = arith.mulf %2, %3 : vector<8x128xf32>
    %c0_3 = arith.constant 0 : index
    %c0_4 = arith.constant 0 : index
    %5 = vector.load %arg3[%c0_3, %c0_4] : memref<1x128xf32, #tpu.memory_space<vmem>>, vector<1x128xf32>
    %6 = vector.broadcast %5 : vector<1x128xf32> to vector<8x128xf32>
    %7 = arith.addf %4, %6 : vector<8x128xf32>
    %8 = math.sin %7 : vector<8x128xf32>
    %9 = arith.truncf %8 : vector<8x128xf32> to vector<8x128xbf16>
    %c0_5 = arith.constant 0 : index
    %c0_6 = arith.constant 0 : index
    %10 = vector.load %arg4[%c0_5, %c0_6] : memref<128x512xbf16, #tpu.memory_space<vmem>>, vector<128x512xbf16>
    %cst = arith.constant dense<0.000000e+00> : vector<8x512xf32>
    %11 = tpu.matmul %9, %10, %cst {dimension_numbers = #tpu.dot_dimension_numbers<[1], [0], [0], [1], [0, 0, 1, 1], [], []>} : vector<8x128xbf16>, vector<128x512xbf16>, vector<8x512xf32> -> vector<8x512xf32>
    %c0_7 = arith.constant 0 : index
    %c0_8 = arith.constant 0 : index
    %12 = vector.load %arg5[%c0_7, %c0_8] : memref<1x512xf32, #tpu.memory_space<vmem>>, vector<1x512xf32>
    %13 = vector.broadcast %12 : vector<1x512xf32> to vector<8x512xf32>
    %14 = arith.addf %11, %13 : vector<8x512xf32>
    %15 = arith.truncf %14 : vector<8x512xf32> to vector<8x512xbf16>
    %16 = arith.negf %15 : vector<8x512xbf16>
    %17 = math.exp %16 : vector<8x512xbf16>
    %cst_9 = arith.constant 1.000000e+00 : bf16
    %18 = vector.broadcast %cst_9 : bf16 to vector<8x512xbf16>
    %19 = arith.addf %18, %17 : vector<8x512xbf16>
    %20 = arith.divf %18, %19 : vector<8x512xbf16>
    %21 = arith.mulf %15, %20 : vector<8x512xbf16>
    %c0_10 = arith.constant 0 : index
    %c0_11 = arith.constant 0 : index
    %22 = vector.load %arg6[%c0_10, %c0_11] : memref<512x512xbf16, #tpu.memory_space<vmem>>, vector<512x512xbf16>
    %cst_12 = arith.constant dense<0.000000e+00> : vector<8x512xf32>
    %23 = tpu.matmul %21, %22, %cst_12 {dimension_numbers = #tpu.dot_dimension_numbers<[1], [0], [0], [1], [0, 0, 1, 1], [], []>} : vector<8x512xbf16>, vector<512x512xbf16>, vector<8x512xf32> -> vector<8x512xf32>
    %c0_13 = arith.constant 0 : index
    %c0_14 = arith.constant 0 : index
    %24 = vector.load %arg7[%c0_13, %c0_14] : memref<1x512xf32, #tpu.memory_space<vmem>>, vector<1x512xf32>
    %25 = vector.broadcast %24 : vector<1x512xf32> to vector<8x512xf32>
    %26 = arith.addf %23, %25 : vector<8x512xf32>
    %27 = arith.truncf %26 : vector<8x512xf32> to vector<8x512xbf16>
    %28 = arith.negf %27 : vector<8x512xbf16>
    %29 = math.exp %28 : vector<8x512xbf16>
    %cst_15 = arith.constant 1.000000e+00 : bf16
    %30 = vector.broadcast %cst_15 : bf16 to vector<8x512xbf16>
    %31 = arith.addf %30, %29 : vector<8x512xbf16>
    %32 = arith.divf %30, %31 : vector<8x512xbf16>
    %33 = arith.mulf %27, %32 : vector<8x512xbf16>
    %c0_16 = arith.constant 0 : index
    %c0_17 = arith.constant 0 : index
    %34 = vector.load %arg8[%c0_16, %c0_17] : memref<8x512xbf16, #tpu.memory_space<vmem>>, vector<8x512xbf16>
    tpu.vector_store %arg8[%c0_16, %c0_17], %33 {strides = array<i32>} : memref<8x512xbf16, #tpu.memory_space<vmem>>, vector<8x512xbf16>,
    return
  }
  func.func @transform_0(%arg0: i32) -> (i32, i32) {
    %c0_i32 = arith.constant 0 : i32
    %c0_i32_0 = arith.constant 0 : i32
    return %arg0, %c0_i32 : i32, i32
  }
  func.func @transform_1(%arg0: i32) -> (i32, i32) {
    %c0_i32 = arith.constant 0 : i32
    %c0_i32_0 = arith.constant 0 : i32
    %c0_i32_1 = arith.constant 0 : i32
    return %c0_i32, %c0_i32_0 : i32, i32
  }
  func.func @transform_2(%arg0: i32) -> (i32, i32) {
    %c0_i32 = arith.constant 0 : i32
    %c0_i32_0 = arith.constant 0 : i32
    %c0_i32_1 = arith.constant 0 : i32
    return %c0_i32, %c0_i32_0 : i32, i32
  }
  func.func @transform_3(%arg0: i32) -> (i32, i32) {
    %c0_i32 = arith.constant 0 : i32
    %c0_i32_0 = arith.constant 0 : i32
    %c0_i32_1 = arith.constant 0 : i32
    return %c0_i32, %c0_i32_0 : i32, i32
  }
  func.func @transform_4(%arg0: i32) -> (i32, i32) {
    %c0_i32 = arith.constant 0 : i32
    %c0_i32_0 = arith.constant 0 : i32
    %c0_i32_1 = arith.constant 0 : i32
    return %c0_i32, %c0_i32_0 : i32, i32
  }
  func.func @transform_5(%arg0: i32) -> (i32, i32) {
    %c0_i32 = arith.constant 0 : i32
    %c0_i32_0 = arith.constant 0 : i32
    %c0_i32_1 = arith.constant 0 : i32
    return %c0_i32, %c0_i32_0 : i32, i32
  }
  func.func @transform_6(%arg0: i32) -> (i32, i32) {
    %c0_i32 = arith.constant 0 : i32
    %c0_i32_0 = arith.constant 0 : i32
    %c0_i32_1 = arith.constant 0 : i32
    return %c0_i32, %c0_i32_0 : i32, i32
  }
  func.func @transform_7(%arg0: i32) -> (i32, i32) {
    %c0_i32 = arith.constant 0 : i32
    %c0_i32_0 = arith.constant 0 : i32
    return %arg0, %c0_i32 : i32, i32
  }
}

</mosaic_0001>

<llo_original>
// kernel: _time_embedding_impl.1
$region0: #{_time_embedding_impl.1}
  #allocation0 [shape = 'u32[]', space=smem, size = 0x4, offset = 0x4, fixed_abs, tag = 'smem constant byte address 0x4 - core index']
  #allocation1 [shape = 'u32[144,128]{1,0:T(1,128)}', space=vmem, size = 0x12000, scoped, tag = 'internal scratch']
  %s0 = inlined_call_operand.vmem [shape: f32[8,1], index: 0, kind: input, shape index: {}]
  %s1 = inlined_call_operand.vmem [shape: f32[1,128], index: 1, kind: input, shape index: {}]
  %s2 = inlined_call_operand.vmem [shape: f32[1,128], index: 2, kind: input, shape index: {}]
  %s3 = inlined_call_operand.hbm [shape: bf16[128,512], index: 3, kind: input, shape index: {}]
  %s4 = inlined_call_operand.vmem [shape: f32[1,512], index: 4, kind: input, shape index: {}]
  %s5 = inlined_call_operand.hbm [shape: bf16[512,512], index: 5, kind: input, shape index: {}]
  %s6 = inlined_call_operand.vmem [shape: f32[1,512], index: 6, kind: input, shape index: {}]
  %s7 = inlined_call_operand.hbm [shape: bf16[8,512], index: 7, kind: output, shape index: {}]
  %s8 = sld [smem:[#allocation0]]
  $region46: #{_time_embedding_impl.1} parent=0
    _
  %s10 = ssub.s32 1, %s8
  %s11 = scalar_select 0, %s10, %s8
  $region1: #{_time_embedding_impl.1} parent=0
    #allocation2 [shape = 'u8[131072]{0}', space=vmem, size = 0x20000, scoped, tag = 'input window, operand 3, single buffered']
    #allocation3 [shape = 's32[1]{0}', space=sflag, size = 0x4, scoped, tag = 'scoped memory for _time_embedding_impl.1']
    #allocation4 [shape = 's32[1]{0}', space=sflag, size = 0x4, scoped, tag = 'scoped memory for _time_embedding_impl.1']
    #allocation5 [shape = 'u8[524288]{0}', space=vmem, size = 0x80000, scoped, tag = 'input window, operand 5, single buffered']
    #allocation6 [shape = 's32[1]{0}', space=sflag, size = 0x4, scoped, tag = 'scoped memory for _time_embedding_impl.1']
    #allocation7 [shape = 'u8[8192]{0}', space=vmem, size = 0x2000, scoped, tag = 'output window, operand 0, single buffered']
    %12 = vsyncpa [#allocation3], 0
    %13 = vsyncpa [#allocation6], 0
    %14 = vsyncpa [#allocation4], 0
    // Predicated region
    $region2: #{_time_embedding_impl.1} parent=1 // pred_check
      _
    $region3: #{_time_embedding_impl.1} parent=1 // pred_check_branch
      %16 = sbr.rel (0) target = $region5
    $region4: #{_time_embedding_impl.1} parent=1 // pred_region
      _
    $region5: #{_time_embedding_impl.1} parent=1 // pred_fallthru
      _
    // Predicated region
    $region6: #{_time_embedding_impl.1} parent=1 // pred_check
      _
    $region7: #{_time_embedding_impl.1} parent=1 // pred_check_branch
      %18 = sbr.rel (0) target = $region9
    $region8: #{_time_embedding_impl.1} parent=1 // pred_region
      _
    $region9: #{_time_embedding_impl.1} parent=1 // pred_fallthru
      _
    // Predicated region
    $region10: #{_time_embedding_impl.1} parent=1 // pred_check
      _
    $region11: #{_time_embedding_impl.1} parent=1 // pred_check_branch
      %20 = sbr.rel (0) target = $region13
    $region12: #{_time_embedding_impl.1} parent=1 // pred_region
      _
    $region13: #{_time_embedding_impl.1} parent=1 // pred_fallthru
      _
    // Predicated region
    $region14: #{_time_embedding_impl.1} parent=1 // pred_check
      _
    $region15: #{_time_embedding_impl.1} parent=1 // pred_check_branch
      %22 = sbr.rel (0) target = $region17
    $region16: #{_time_embedding_impl.1} parent=1 // pred_region
      %s24 = ssub.s32 4096, 4096
      %25 = vsyncadd [#allocation3], %s24
      %s26 = sshll.u32 [#allocation2], 4
      %s27 = int_to_ptr.vmem [resolvable:$true] %s26
      %32 = dma.hbm_to_vmem [thread:$0]  %s3, 4096, %s27, [#allocation3], 256, 256, 16
    $region17: #{_time_embedding_impl.1} parent=1 // pred_fallthru
      _
    // Predicated region
    $region18: #{_time_embedding_impl.1} parent=1 // pred_check
      _
    $region19: #{_time_embedding_impl.1} parent=1 // pred_check_branch
      %34 = sbr.rel (0) target = $region21
    $region20: #{_time_embedding_impl.1} parent=1 // pred_region
      _
    $region21: #{_time_embedding_impl.1} parent=1 // pred_fallthru
      _
    // Predicated region
    $region22: #{_time_embedding_impl.1} parent=1 // pred_check
      _
    $region23: #{_time_embedding_impl.1} parent=1 // pred_check_branch
      %36 = sbr.rel (0) target = $region25
    $region24: #{_time_embedding_impl.1} parent=1 // pred_region
      %s38 = ssub.s32 16384, 16384
      %39 = vsyncadd [#allocation6], %s38
      %s40 = sshll.u32 [#allocation5], 4
      %s41 = int_to_ptr.vmem [resolvable:$true] %s40
      %46 = dma.hbm_to_vmem [thread:$0]  %s5, 16384, %s41, [#allocation6], 256, 256, 16
    $region25: #{_time_embedding_impl.1} parent=1 // pred_fallthru
      _
    // Predicated region
    $region26: #{_time_embedding_impl.1} parent=1 // pred_check
      _
    $region27: #{_time_embedding_impl.1} parent=1 // pred_check_branch
      %48 = sbr.rel (0) target = $region29
    $region28: #{_time_embedding_impl.1} parent=1 // pred_region
      _
    $region29: #{_time_embedding_impl.1} parent=1 // pred_fallthru
      _
    // Predicated region
    $region30: #{_time_embedding_impl.1} parent=1 // pred_check
      _
    $region31: #{_time_embedding_impl.1} parent=1 // pred_check_branch
      %50 = sbr.rel (0) target = $region33
    $region32: #{_time_embedding_impl.1} parent=1 // pred_region
      %51 = dma.done [#allocation3], 4096
    $region33: #{_time_embedding_impl.1} parent=1 // pred_fallthru
      _
    // Predicated region
    $region34: #{_time_embedding_impl.1} parent=1 // pred_check
      _
    $region35: #{_time_embedding_impl.1} parent=1 // pred_check_branch
      %53 = sbr.rel (0) target = $region37
    $region36: #{_time_embedding_impl.1} parent=1 // pred_region
      %54 = dma.done [#allocation6], 16384
    $region37: #{_time_embedding_impl.1} parent=1 // pred_fallthru
      _
    %v57 = vld [vmem:[%s0] sm:$0xff]
    %v58 = vld [vmem:[%s1] sm:$0x1]
    %60 = vset.pattern.permute.xlu0 0
    %61 = vperm.xlu0 %60, %v57
    %v62 = vpop.permute.xlu0 %61
    %v65 = vlaneseq
    %v66 = vshrl.u32 %v65, 7
    %v67 = vsub.s32 0, %v66
    %v68 = vrot.slane %v58, %v67
    %v70 = vmul.f32 %v62, %v68
    %v71 = vld [vmem:[%s2] sm:$0x1]
    %v73 = vlaneseq
    %v74 = vshrl.u32 %v73, 7
    %v75 = vsub.s32 0, %v74
    %v76 = vrot.slane %v71, %v75
    %v78 = vadd.f32 %v70, %v76
    %v79 = vand.u32 2147483647, %v78
    %vm80 = vcmp.le.f32.partialorder %v79, 0.7853982
    %vm81 = vcmp.lt.s32.totalorder %v78, 0
    %v82 = vand.u32 %v78, 2139095040
    %v83 = vshrl.u32 %v82, 23
    %v84 = vsub.s32 %v83, 127
    %v85 = vand.u32 2147483647, %v78
    %v86 = vand.u32 %v85, 8388607
    %v87 = vor.u32 %v86, 8388608
    %v88 = vsub.s32 0, %v87
    %v89 = vadd.s32 %v84, 1
    %vm90 = vcmp.gt.s32.totalorder %v89, 0
    %v91 = vsel %vm90, %v89, 0
    %v92 = vshrl.u32 %v91, 5
    %v93 = vand.u32 %v91, 31
    %v94 = vsub.s32 32, %v93
    %v95 = vshrl.u32 683565275, %v94
    %v96 = vshll.u32 683565275, %v93
    %v97 = vshrl.u32 2475754826, %v94
    %v98 = vor.u32 %v96, %v97
    %v99 = vshll.u32 2475754826, %v93
    %v100 = vshrl.u32 2131351028, %v94
    %v101 = vor.u32 %v99, %v100
    %v102 = vshll.u32 2131351028, %v93
    %v103 = vshrl.u32 2102212464, %v94
    %v104 = vor.u32 %v102, %v103
    %v105 = vshll.u32 2102212464, %v93
    %v106 = vshrl.u32 920167782, %v94
    %v107 = vor.u32 %v105, %v106
    %v108 = vshll.u32 920167782, %v93
    %v109 = vshrl.u32 1326507024, %v94
    %v110 = vor.u32 %v108, %v109
    %vm111 = vcmp.lt.s32.totalorder %v92, 1
    %vm112 = vcmp.lt.s32.totalorder %v92, 2
    %vm113 = vcmp.lt.s32.totalorder %v92, 3
    %vm114 = vcmp.lt.s32.totalorder %v92, 4
    %v115 = vsel %vm111, %v95, %v98
    %v116 = vsel %vm114, %v104, 2102212464
    %v117 = vsel %vm113, %v101, %v116
    %v118 = vsel %vm112, %v115, %v117
    %v119 = vsel %vm111, %v98, %v101
    %v120 = vsel %vm114, %v107, 920167782
    %v121 = vsel %vm113, %v104, %v120
    %v122 = vsel %vm112, %v119, %v121
    %v123 = vsel %vm111, %v101, %v104
    %v124 = vsel %vm114, %v110, 1326507024
    %v125 = vsel %vm113, %v107, %v124
    %v126 = vsel %vm112, %v123, %v125
    %v127 = vshll.u32 %v87, 8
    %v128 = vmul.u32.u64.compose %v127, %v126
    %v129 = vextract.low.u32 %v128
    %v130 = vextract.high.u32 %v128
    %v131 = vmul.u32.u64.compose %v127, %v122
    %v132 = vextract.low.u32 %v131
    %v133 = vextract.high.u32 %v131
    %v134 = vmul.u32 %v127, %v118
    %v135 = vadd.s32 %v130, %v132
    %vm136 = vc.u32 %v130, %v132
    %v137 = vadd.s32 %v133, 1
    %v138 = vsel %vm136, %v137, %v133
    %v139 = vadd.s32 %v134, %v138
    %v140 = vadd.s32 %v139, 536870912
    %v141 = vshrl.u32 %v140, 30
    %v142 = vshll.u32 %v141, 30
    %v143 = vsub.s32 %v139, %v142
    %vm144 = vcmp.lt.s32.totalorder %v143, 0
    %v145 = vsub.s32 0, %v143
    %v146 = vsel %vm144, %v145, %v143
    %v147 = vclz %v146
    %v148 = vsub.s32 %v147, 2
    %vm149 = vcmp.gt.s32.totalorder 0, %v148
    %v150 = vsel %vm149, 0, %v148
    %v151 = vsub.s32 32, %v150
    %v152 = vshll.u32 %v143, %v150
    %v153 = vshrl.u32 %v135, %v151
    %v154 = vor.u32 %v152, %v153
    %v155 = vsub.s32 4294967266, %v150
    %v156 = vadd.s32 %v155, 127
    %v157 = vshll.u32 %v156, 23
    %v158 = vor.u32 4788187, %v157
    %v159 = vand.u32 2147483647, %v158
    %v161 = vcvt.s32.f32 %v154
    %v162 = vmul.f32 %v161, %v159
    %v163 = vxor.u32 %v162, 2147483648
    %v164 = vsel %vm81, %v163, %v162
    %v165 = vsub.s32 4, %v141
    %v166 = vsel %vm81, %v165, %v141
    %v167 = vsel %vm80, %v78, %v164
    %v168 = vsel %vm80, 0, %v166
    %v169 = vcosq.f32.pop %v167
    %v170 = vsinq.f32.pop %v167
    %vm171 = vweird.f32 %v78
    %v172 = vadd.s32 %v168, 3
    %v173 = vand.u32 %v172, 3
    %vm174 = vcmp.lt.s32.totalorder %v173, 2
    %vm175 = vcmp.eq.s32.totalorder %v173, 0
    %v176 = vxor.u32 %v170, 2147483648
    %v177 = vsel %vm175, %v169, %v176
    %vm178 = vcmp.eq.s32.totalorder %v173, 2
    %v179 = vxor.u32 %v169, 2147483648
    %v180 = vsel %vm178, %v179, %v170
    %v181 = vsel %vm174, %v177, %v180
    %v182 = vsel %vm171, nan, %v181
    %v183 = vpack.c.bf16 %v182, %v182
    %v184 = vld [vmem:[#allocation2] sm:$0xff]
    %v185 = vld [vmem:[#allocation2 + $0x8] sm:$0xff]
    %v186 = vld [vmem:[#allocation2 + $0x10] sm:$0xff]
    %v187 = vld [vmem:[#allocation2 + $0x18] sm:$0xff]
    %v188 = vld [vmem:[#allocation2 + $0x20] sm:$0xff]
    %v189 = vld [vmem:[#allocation2 + $0x28] sm:$0xff]
    %v190 = vld [vmem:[#allocation2 + $0x30] sm:$0xff]
    %v191 = vld [vmem:[#allocation2 + $0x38] sm:$0xff]
    %v192 = vld [vmem:[#allocation2 + $0x40] sm:$0xff]
    %v193 = vld [vmem:[#allocation2 + $0x48] sm:$0xff]
    %v194 = vld [vmem:[#allocation2 + $0x50] sm:$0xff]
    %v195 = vld [vmem:[#allocation2 + $0x58] sm:$0xff]
    %v196 = vld [vmem:[#allocation2 + $0x60] sm:$0xff]
    %v197 = vld [vmem:[#allocation2 + $0x68] sm:$0xff]
    %v198 = vld [vmem:[#allocation2 + $0x70] sm:$0xff]
    %v199 = vld [vmem:[#allocation2 + $0x78] sm:$0xff]
    %v200 = vld [vmem:[#allocation2 + $0x80] sm:$0xff]
    %v201 = vld [vmem:[#allocation2 + $0x88] sm:$0xff]
    %v202 = vld [vmem:[#allocation2 + $0x90] sm:$0xff]
    %v203 = vld [vmem:[#allocation2 + $0x98] sm:$0xff]
    %v204 = vld [vmem:[#allocation2 + $0xa0] sm:$0xff]
    %v205 = vld [vmem:[#allocation2 + $0xa8] sm:$0xff]
    %v206 = vld [vmem:[#allocation2 + $0xb0] sm:$0xff]
    %v207 = vld [vmem:[#allocation2 + $0xb8] sm:$0xff]
    %v208 = vld [vmem:[#allocation2 + $0xc0] sm:$0xff]
    %v209 = vld [vmem:[#allocation2 + $0xc8] sm:$0xff]
    %v210 = vld [vmem:[#allocation2 + $0xd0] sm:$0xff]
    %v211 = vld [vmem:[#allocation2 + $0xd8] sm:$0xff]
    %v212 = vld [vmem:[#allocation2 + $0xe0] sm:$0xff]
    %v213 = vld [vmem:[#allocation2 + $0xe8] sm:$0xff]
    %v214 = vld [vmem:[#allocation2 + $0xf0] sm:$0xff]
    %v215 = vld [vmem:[#allocation2 + $0xf8] sm:$0xff]
    %v216 = vld [vmem:[%s4] sm:$0xf]
    %v218 = vlaneseq
    %v219 = vshrl.u32 %v218, 7
    %v220 = vsub.s32 0, %v219
    %v221 = vrot.slane %v216, %v220
    %v222 = vlaneseq
    %v223 = vshrl.u32 %v222, 7
    %v224 = vsub.s32 1, %v223
    %v225 = vrot.slane %v216, %v224
    %v226 = vlaneseq
    %v227 = vshrl.u32 %v226, 7
    %v228 = vsub.s32 2, %v227
    %v229 = vrot.slane %v216, %v228
    %v230 = vlaneseq
    %v231 = vshrl.u32 %v230, 7
    %v232 = vsub.s32 3, %v231
    %v233 = vrot.slane %v216, %v232
    %v270 = vunpack.c.l.b16 %v184
    %v271 = vunpack.c.h.b16 %v184
    %v272 = vunpack.c.l.b16 %v185
    %v273 = vunpack.c.h.b16 %v185
    %v274 = vunpack.c.l.b16 %v186
    %v275 = vunpack.c.h.b16 %v186
    %v276 = vunpack.c.l.b16 %v187
    %v277 = vunpack.c.h.b16 %v187
    %v278 = vunpack.c.l.b16 %v188
    %v279 = vunpack.c.h.b16 %v188
    %v280 = vunpack.c.l.b16 %v189
    %v281 = vunpack.c.h.b16 %v189
    %v282 = vunpack.c.l.b16 %v190
    %v283 = vunpack.c.h.b16 %v190
    %v284 = vunpack.c.l.b16 %v191
    %v285 = vunpack.c.h.b16 %v191
    %v286 = vunpack.c.l.b16 %v192
    %v287 = vunpack.c.h.b16 %v192
    %v288 = vunpack.c.l.b16 %v193
    %v289 = vunpack.c.h.b16 %v193
    %v290 = vunpack.c.l.b16 %v194
    %v291 = vunpack.c.h.b16 %v194
    %v292 = vunpack.c.l.b16 %v195
    %v293 = vunpack.c.h.b16 %v195
    %v294 = vunpack.c.l.b16 %v196
    %v295 = vunpack.c.h.b16 %v196
    %v296 = vunpack.c.l.b16 %v197
    %v297 = vunpack.c.h.b16 %v197
    %v298 = vunpack.c.l.b16 %v198
    %v299 = vunpack.c.h.b16 %v198
    %v300 = vunpack.c.l.b16 %v199
    %v301 = vunpack.c.h.b16 %v199
    %v302 = vunpack.c.l.b16 %v200
    %v303 = vunpack.c.h.b16 %v200
    %v304 = vunpack.c.l.b16 %v201
    %v305 = vunpack.c.h.b16 %v201
    %v306 = vunpack.c.l.b16 %v202
    %v307 = vunpack.c.h.b16 %v202
    %v308 = vunpack.c.l.b16 %v203
    %v309 = vunpack.c.h.b16 %v203
    %v310 = vunpack.c.l.b16 %v204
    %v311 = vunpack.c.h.b16 %v204
    %v312 = vunpack.c.l.b16 %v205
    %v313 = vunpack.c.h.b16 %v205
    %v314 = vunpack.c.l.b16 %v206
    %v315 = vunpack.c.h.b16 %v206
    %v316 = vunpack.c.l.b16 %v207
    %v317 = vunpack.c.h.b16 %v207
    %v318 = vunpack.c.l.b16 %v208
    %v319 = vunpack.c.h.b16 %v208
    %v320 = vunpack.c.l.b16 %v209
    %v321 = vunpack.c.h.b16 %v209
    %v322 = vunpack.c.l.b16 %v210
    %v323 = vunpack.c.h.b16 %v210
    %v324 = vunpack.c.l.b16 %v211
    %v325 = vunpack.c.h.b16 %v211
    %v326 = vunpack.c.l.b16 %v212
    %v327 = vunpack.c.h.b16 %v212
    %v328 = vunpack.c.l.b16 %v213
    %v329 = vunpack.c.h.b16 %v213
    %v330 = vunpack.c.l.b16 %v214
    %v331 = vunpack.c.h.b16 %v214
    %v332 = vunpack.c.l.b16 %v215
    %v333 = vunpack.c.h.b16 %v215
    %v334 = vpack.c.b16 %v274, %v270
    %v335 = vpack.c.b16 %v275, %v271
    %v336 = vpack.c.b16 %v276, %v272
    %v337 = vpack.c.b16 %v277, %v273
    %v338 = vpack.c.b16 %v282, %v278
    %v339 = vpack.c.b16 %v283, %v279
    %v340 = vpack.c.b16 %v284, %v280
    %v341 = vpack.c.b16 %v285, %v281
    %v342 = vpack.c.b16 %v290, %v286
    %v343 = vpack.c.b16 %v291, %v287
    %v344 = vpack.c.b16 %v292, %v288
    %v345 = vpack.c.b16 %v293, %v289
    %v346 = vpack.c.b16 %v298, %v294
    %v347 = vpack.c.b16 %v299, %v295
    %v348 = vpack.c.b16 %v300, %v296
    %v349 = vpack.c.b16 %v301, %v297
    %v350 = vpack.c.b16 %v306, %v302
    %v351 = vpack.c.b16 %v307, %v303
    %v352 = vpack.c.b16 %v308, %v304
    %v353 = vpack.c.b16 %v309, %v305
    %v354 = vpack.c.b16 %v314, %v310
    %v355 = vpack.c.b16 %v315, %v311
    %v356 = vpack.c.b16 %v316, %v312
    %v357 = vpack.c.b16 %v317, %v313
    %v358 = vpack.c.b16 %v322, %v318
    %v359 = vpack.c.b16 %v323, %v319
    %v360 = vpack.c.b16 %v324, %v320
    %v361 = vpack.c.b16 %v325, %v321
    %v362 = vpack.c.b16 %v330, %v326
    %v363 = vpack.c.b16 %v331, %v327
    %v364 = vpack.c.b16 %v332, %v328
    %v365 = vpack.c.b16 %v333, %v329
    %398 = vmatprep.subr.bf16.mxu0 %v335
    %399 = vmatpush1.bf16.msra.mxu0 %v334
    %400 = vmatprep.subr.bf16.mxu0 %v339
    %401 = vmatpush1.bf16.msra.mxu0 %v338
    %402 = vmatprep.subr.bf16.mxu0 %v343
    %403 = vmatpush1.bf16.msra.mxu0 %v342
    %404 = vmatprep.subr.bf16.mxu0 %v347
    %405 = vmatpush1.bf16.msra.mxu0 %v346
    %406 = vmatprep.subr.bf16.mxu0 %v351
    %407 = vmatpush1.bf16.msra.mxu0 %v350
    %408 = vmatprep.subr.bf16.mxu0 %v355
    %409 = vmatpush1.bf16.msra.mxu0 %v354
    %410 = vmatprep.subr.bf16.mxu0 %v359
    %411 = vmatpush1.bf16.msra.mxu0 %v358
    %412 = vmatprep.subr.bf16.mxu0 %v363
    %413 = vmatpush1.bf16.msra.mxu0 %v362
    %414 = vmatprep.subr.bf16.mxu0 0
    %415 = vmatpush1.bf16.msra.mxu0 0
    %416 = vmatprep.subr.bf16.mxu0 0
    %417 = vmatpush1.bf16.msra.mxu0 0
    %418 = vmatprep.subr.bf16.mxu0 0
    %419 = vmatpush1.bf16.msra.mxu0 0
    %420 = vmatprep.subr.bf16.mxu0 0
    %421 = vmatpush1.bf16.msra.mxu0 0
    %422 = vmatprep.subr.bf16.mxu0 0
    %423 = vmatpush1.bf16.msra.mxu0 0
    %424 = vmatprep.subr.bf16.mxu0 0
    %425 = vmatpush1.bf16.msra.mxu0 0
    %426 = vmatprep.subr.bf16.mxu0 0
    %427 = vmatpush1.bf16.msra.mxu0 0
    %428 = vmatprep.subr.bf16.mxu0 0
    %429 = vmatpush1.bf16.msra.mxu0 0
    %430 = vmatprep.mubr.bf16.mxu0 0
    %431 = vmatmul.mubr.bf16.gmra.mrb[0].mxu0 %v183
    %v432 = vpop.f32.mrb[0].mxu0
    %v433 = vadd.f32 %v221, %v432
    %v434 = vpop.f32.mrb[0].mxu0
    %v435 = vadd.f32 %v225, %v434
    %v436 = vpop.f32.mrb[0].mxu0
    %v437 = vpop.f32.mrb[0].mxu0
    %438 = vdwg.mxu0
    %439 = vmatprep.subr.bf16.mxu0 %v337
    %440 = vmatpush1.bf16.msra.mxu0 %v336
    %441 = vmatprep.subr.bf16.mxu0 %v341
    %442 = vmatpush1.bf16.msra.mxu0 %v340
    %443 = vmatprep.subr.bf16.mxu0 %v345
    %444 = vmatpush1.bf16.msra.mxu0 %v344
    %445 = vmatprep.subr.bf16.mxu0 %v349
    %446 = vmatpush1.bf16.msra.mxu0 %v348
    %447 = vmatprep.subr.bf16.mxu0 %v353
    %448 = vmatpush1.bf16.msra.mxu0 %v352
    %449 = vmatprep.subr.bf16.mxu0 %v357
    %450 = vmatpush1.bf16.msra.mxu0 %v356
    %451 = vmatprep.subr.bf16.mxu0 %v361
    %452 = vmatpush1.bf16.msra.mxu0 %v360
    %453 = vmatprep.subr.bf16.mxu0 %v365
    %454 = vmatpush1.bf16.msra.mxu0 %v364
    %455 = vmatprep.subr.bf16.mxu0 0
    %456 = vmatpush1.bf16.msra.mxu0 0
    %457 = vmatprep.subr.bf16.mxu0 0
    %458 = vmatpush1.bf16.msra.mxu0 0
    %459 = vmatprep.subr.bf16.mxu0 0
    %460 = vmatpush1.bf16.msra.mxu0 0
    %461 = vmatprep.subr.bf16.mxu0 0
    %462 = vmatpush1.bf16.msra.mxu0 0
    %463 = vmatprep.subr.bf16.mxu0 0
    %464 = vmatpush1.bf16.msra.mxu0 0
    %465 = vmatprep.subr.bf16.mxu0 0
    %466 = vmatpush1.bf16.msra.mxu0 0
    %467 = vmatprep.subr.bf16.mxu0 0
    %468 = vmatpush1.bf16.msra.mxu0 0
    %469 = vmatprep.subr.bf16.mxu0 0
    %470 = vmatpush1.bf16.msra.mxu0 0
    %471 = vmatprep.mubr.bf16.mxu0 0
    %472 = vmatmul.mubr.bf16.gmra.mrb[0].mxu0 %v183
    %v473 = vpop.f32.mrb[0].mxu0
    %v474 = vadd.f32 %v229, %v473
    %v475 = vpop.f32.mrb[0].mxu0
    %v476 = vadd.f32 %v233, %v475
    %v477 = vpop.f32.mrb[0].mxu0
    %v478 = vpop.f32.mrb[0].mxu0
    %479 = vdwg.mxu0
    %v480 = vpack.c.bf16 %v433, %v433
    %v481 = vpack.c.bf16 %v435, %v435
    %v482 = vpack.c.bf16 %v474, %v474
    %v483 = vpack.c.bf16 %v476, %v476
    %v484 = vxor.u32 %v480, 2147516416
    %v485 = vxor.u32 %v481, 2147516416
    %v486 = vxor.u32 %v482, 2147516416
    %v487 = vxor.u32 %v483, 2147516416
    %v489 = vmul.bf16 %v484, 1069105081
    %v490 = vpow.bf16.pop %v489
    %v492 = vmul.bf16 %v485, 1069105081
    %v493 = vpow.bf16.pop %v492
    %v495 = vmul.bf16 %v486, 1069105081
    %v496 = vpow.bf16.pop %v495
    %v498 = vmul.bf16 %v487, 1069105081
    %v499 = vpow.bf16.pop %v498
    %v500 = vadd.bf16 %v490, 1065369472
    %v501 = vadd.bf16 %v493, 1065369472
    %v502 = vadd.bf16 %v496, 1065369472
    %v503 = vadd.bf16 %v499, 1065369472
    %v504 = vrcp.bf16.pop %v500
    %v505 = vmul.bf16 1065369472, %v504
    %v506 = vrcp.bf16.pop %v501
    %v507 = vmul.bf16 1065369472, %v506
    %v508 = vrcp.bf16.pop %v502
    %v509 = vmul.bf16 1065369472, %v508
    %v510 = vrcp.bf16.pop %v503
    %v511 = vmul.bf16 1065369472, %v510
    %v512 = vmul.bf16 %v480, %v505
    %v513 = vmul.bf16 %v481, %v507
    %v514 = vmul.bf16 %v482, %v509
    %v515 = vmul.bf16 %v483, %v511
    %v516 = vld [vmem:[#allocation5] sm:$0xff]
    %v517 = vld [vmem:[#allocation5 + $0x8] sm:$0xff]
    %v518 = vld [vmem:[#allocation5 + $0x10] sm:$0xff]
    %v519 = vld [vmem:[#allocation5 + $0x18] sm:$0xff]
    %v520 = vld [vmem:[#allocation5 + $0x20] sm:$0xff]
    %v521 = vld [vmem:[#allocation5 + $0x28] sm:$0xff]
    %v522 = vld [vmem:[#allocation5 + $0x30] sm:$0xff]
    %v523 = vld [vmem:[#allocation5 + $0x38] sm:$0xff]
    %v524 = vld [vmem:[#allocation5 + $0x40] sm:$0xff]
    %v525 = vld [vmem:[#allocation5 + $0x48] sm:$0xff]
    %v526 = vld [vmem:[#allocation5 + $0x50] sm:$0xff]
    %v527 = vld [vmem:[#allocation5 + $0x58] sm:$0xff]
    %v528 = vld [vmem:[#allocation5 + $0x60] sm:$0xff]
    %v529 = vld [vmem:[#allocation5 + $0x68] sm:$0xff]
    %v530 = vld [vmem:[#allocation5 + $0x70] sm:$0xff]
    %v531 = vld [vmem:[#allocation5 + $0x78] sm:$0xff]
    %v532 = vld [vmem:[#allocation5 + $0x80] sm:$0xff]
    %v533 = vld [vmem:[#allocation5 + $0x88] sm:$0xff]
    %v534 = vld [vmem:[#allocation5 + $0x90] sm:$0xff]
    %v535 = vld [vmem:[#allocation5 + $0x98] sm:$0xff]
    %v536 = vld [vmem:[#allocation5 + $0xa0] sm:$0xff]
    %v537 = vld [vmem:[#allocation5 + $0xa8] sm:$0xff]
    %v538 = vld [vmem:[#allocation5 + $0xb0] sm:$0xff]
    %v539 = vld [vmem:[#allocation5 + $0xb8] sm:$0xff]
    %v540 = vld [vmem:[#allocation5 + $0xc0] sm:$0xff]
    %v541 = vld [vmem:[#allocation5 + $0xc8] sm:$0xff]
    %v542 = vld [vmem:[#allocation5 + $0xd0] sm:$0xff]
    %v543 = vld [vmem:[#allocation5 + $0xd8] sm:$0xff]
    %v544 = vld [vmem:[#allocation5 + $0xe0] sm:$0xff]
    %v545 = vld [vmem:[#allocation5 + $0xe8] sm:$0xff]
    %v546 = vld [vmem:[#allocation5 + $0xf0] sm:$0xff]
    %v547 = vld [vmem:[#allocation5 + $0xf8] sm:$0xff]
    %v548 = vld [vmem:[#allocation5 + $0x100] sm:$0xff]
    %v549 = vld [vmem:[#allocation5 + $0x108] sm:$0xff]
    %v550 = vld [vmem:[#allocation5 + $0x110] sm:$0xff]
    %v551 = vld [vmem:[#allocation5 + $0x118] sm:$0xff]
    %v552 = vld [vmem:[#allocation5 + $0x120] sm:$0xff]
    %v553 = vld [vmem:[#allocation5 + $0x128] sm:$0xff]
    %v554 = vld [vmem:[#allocation5 + $0x130] sm:$0xff]
    %v555 = vld [vmem:[#allocation5 + $0x138] sm:$0xff]
    %v556 = vld [vmem:[#allocation5 + $0x140] sm:$0xff]
    %v557 = vld [vmem:[#allocation5 + $0x148] sm:$0xff]
    %v558 = vld [vmem:[#allocation5 + $0x150] sm:$0xff]
    %v559 = vld [vmem:[#allocation5 + $0x158] sm:$0xff]
    %v560 = vld [vmem:[#allocation5 + $0x160] sm:$0xff]
    %v561 = vld [vmem:[#allocation5 + $0x168] sm:$0xff]
    %v562 = vld [vmem:[#allocation5 + $0x170] sm:$0xff]
    %v563 = vld [vmem:[#allocation5 + $0x178] sm:$0xff]
    %v564 = vld [vmem:[#allocation5 + $0x180] sm:$0xff]
    %v565 = vld [vmem:[#allocation5 + $0x188] sm:$0xff]
    %v566 = vld [vmem:[#allocation5 + $0x190] sm:$0xff]
    %v567 = vld [vmem:[#allocation5 + $0x198] sm:$0xff]
    %v568 = vld [vmem:[#allocation5 + $0x1a0] sm:$0xff]
    %v569 = vld [vmem:[#allocation5 + $0x1a8] sm:$0xff]
    %v570 = vld [vmem:[#allocation5 + $0x1b0] sm:$0xff]
    %v571 = vld [vmem:[#allocation5 + $0x1b8] sm:$0xff]
    %v572 = vld [vmem:[#allocation5 + $0x1c0] sm:$0xff]
    %v573 = vld [vmem:[#allocation5 + $0x1c8] sm:$0xff]
    %v574 = vld [vmem:[#allocation5 + $0x1d0] sm:$0xff]
    %v575 = vld [vmem:[#allocation5 + $0x1d8] sm:$0xff]
    %v576 = vld [vmem:[#allocation5 + $0x1e0] sm:$0xff]
    %v577 = vld [vmem:[#allocation5 + $0x1e8] sm:$0xff]
    %v578 = vld [vmem:[#allocation5 + $0x1f0] sm:$0xff]
    %v579 = vld [vmem:[#allocation5 + $0x1f8] sm:$0xff]
    %v580 = vld [vmem:[#allocation5 + $0x200] sm:$0xff]
    %v581 = vld [vmem:[#allocation5 + $0x208] sm:$0xff]
    %v582 = vld [vmem:[#allocation5 + $0x210] sm:$0xff]
    %v583 = vld [vmem:[#allocation5 + $0x218] sm:$0xff]
    %v584 = vld [vmem:[#allocation5 + $0x220] sm:$0xff]
    %v585 = vld [vmem:[#allocation5 + $0x228] sm:$0xff]
    %v586 = vld [vmem:[#allocation5 + $0x230] sm:$0xff]
    %v587 = vld [vmem:[#allocation5 + $0x238] sm:$0xff]
    %v588 = vld [vmem:[#allocation5 + $0x240] sm:$0xff]
    %v589 = vld [vmem:[#allocation5 + $0x248] sm:$0xff]
    %v590 = vld [vmem:[#allocation5 + $0x250] sm:$0xff]
    %v591 = vld [vmem:[#allocation5 + $0x258] sm:$0xff]
    %v592 = vld [vmem:[#allocation5 + $0x260] sm:$0xff]
    %v593 = vld [vmem:[#allocation5 + $0x268] sm:$0xff]
    %v594 = vld [vmem:[#allocation5 + $0x270] sm:$0xff]
    %v595 = vld [vmem:[#allocation5 + $0x278] sm:$0xff]
    %v596 = vld [vmem:[#allocation5 + $0x280] sm:$0xff]
    %v597 = vld [vmem:[#allocation5 + $0x288] sm:$0xff]
    %v598 = vld [vmem:[#allocation5 + $0x290] sm:$0xff]
    %v599 = vld [vmem:[#allocation5 + $0x298] sm:$0xff]
    %v600 = vld [vmem:[#allocation5 + $0x2a0] sm:$0xff]
    %v601 = vld [vmem:[#allocation5 + $0x2a8] sm:$0xff]
    %v602 = vld [vmem:[#allocation5 + $0x2b0] sm:$0xff]
    %v603 = vld [vmem:[#allocation5 + $0x2b8] sm:$0xff]
    %v604 = vld [vmem:[#allocation5 + $0x2c0] sm:$0xff]
    %v605 = vld [vmem:[#allocation5 + $0x2c8] sm:$0xff]
    %v606 = vld [vmem:[#allocation5 + $0x2d0] sm:$0xff]
    %v607 = vld [vmem:[#allocation5 + $0x2d8] sm:$0xff]
    %v608 = vld [vmem:[#allocation5 + $0x2e0] sm:$0xff]
    %v609 = vld [vmem:[#allocation5 + $0x2e8] sm:$0xff]
    %v610 = vld [vmem:[#allocation5 + $0x2f0] sm:$0xff]
    %v611 = vld [vmem:[#allocation5 + $0x2f8] sm:$0xff]
    %v612 = vld [vmem:[#allocation5 + $0x300] sm:$0xff]
    %v613 = vld [vmem:[#allocation5 + $0x308] sm:$0xff]
    %v614 = vld [vmem:[#allocation5 + $0x310] sm:$0xff]
    %v615 = vld [vmem:[#allocation5 + $0x318] sm:$0xff]
    %v616 = vld [vmem:[#allocation5 + $0x320] sm:$0xff]
    %v617 = vld [vmem:[#allocation5 + $0x328] sm:$0xff]
    %v618 = vld [vmem:[#allocation5 + $0x330] sm:$0xff]
    %v619 = vld [vmem:[#allocation5 + $0x338] sm:$0xff]
    %v620 = vld [vmem:[#allocation5 + $0x340] sm:$0xff]
    %v621 = vld [vmem:[#allocation5 + $0x348] sm:$0xff]
    %v622 = vld [vmem:[#allocation5 + $0x350] sm:$0xff]
    %v623 = vld [vmem:[#allocation5 + $0x358] sm:$0xff]
    %v624 = vld [vmem:[#allocation5 + $0x360] sm:$0xff]
    %v625 = vld [vmem:[#allocation5 + $0x368] sm:$0xff]
    %v626 = vld [vmem:[#allocation5 + $0x370] sm:$0xff]
    %v627 = vld [vmem:[#allocation5 + $0x378] sm:$0xff]
    %v628 = vld [vmem:[#allocation5 + $0x380] sm:$0xff]
    %v629 = vld [vmem:[#allocation5 + $0x388] sm:$0xff]
    %v630 = vld [vmem:[#allocation5 + $0x390] sm:$0xff]
    %v631 = vld [vmem:[#allocation5 + $0x398] sm:$0xff]
    %v632 = vld [vmem:[#allocation5 + $0x3a0] sm:$0xff]
    %v633 = vld [vmem:[#allocation5 + $0x3a8] sm:$0xff]
    %v634 = vld [vmem:[#allocation5 + $0x3b0] sm:$0xff]
    %v635 = vld [vmem:[#allocation5 + $0x3b8] sm:$0xff]
    %v636 = vld [vmem:[#allocation5 + $0x3c0] sm:$0xff]
    %v637 = vld [vmem:[#allocation5 + $0x3c8] sm:$0xff]
    %v638 = vld [vmem:[#allocation5 + $0x3d0] sm:$0xff]
    %v639 = vld [vmem:[#allocation5 + $0x3d8] sm:$0xff]
    %v640 = vld [vmem:[#allocation5 + $0x3e0] sm:$0xff]
    %v641 = vld [vmem:[#allocation5 + $0x3e8] sm:$0xff]
    %v642 = vld [vmem:[#allocation5 + $0x3f0] sm:$0xff]
    %v643 = vld [vmem:[#allocation5 + $0x3f8] sm:$0xff]
    %v644 = vld [vmem:[%s6] sm:$0xf]
    %v646 = vlaneseq
    %v647 = vshrl.u32 %v646, 7
    %v648 = vsub.s32 0, %v647
    %v649 = vrot.slane %v644, %v648
    %v650 = vlaneseq
    %v651 = vshrl.u32 %v650, 7
    %v652 = vsub.s32 1, %v651
    %v653 = vrot.slane %v644, %v652
    %v654 = vlaneseq
    %v655 = vshrl.u32 %v654, 7
    %v656 = vsub.s32 2, %v655
    %v657 = vrot.slane %v644, %v656
    %v658 = vlaneseq
    %v659 = vshrl.u32 %v658, 7
    %v660 = vsub.s32 3, %v659
    %v661 = vrot.slane %v644, %v660
    %v794 = vunpack.c.l.b16 %v516
    %v795 = vunpack.c.h.b16 %v516
    %v796 = vunpack.c.l.b16 %v517
    %v797 = vunpack.c.h.b16 %v517
    %v798 = vunpack.c.l.b16 %v518
    %v799 = vunpack.c.h.b16 %v518
    %v800 = vunpack.c.l.b16 %v519
    %v801 = vunpack.c.h.b16 %v519
    %v802 = vunpack.c.l.b16 %v520
    %v803 = vunpack.c.h.b16 %v520
    %v804 = vunpack.c.l.b16 %v521
    %v805 = vunpack.c.h.b16 %v521
    %v806 = vunpack.c.l.b16 %v522
    %v807 = vunpack.c.h.b16 %v522
    %v808 = vunpack.c.l.b16 %v523
    %v809 = vunpack.c.h.b16 %v523
    %v810 = vunpack.c.l.b16 %v524
    %v811 = vunpack.c.h.b16 %v524
    %v812 = vunpack.c.l.b16 %v525
    %v813 = vunpack.c.h.b16 %v525
    %v814 = vunpack.c.l.b16 %v526
    %v815 = vunpack.c.h.b16 %v526
    %v816 = vunpack.c.l.b16 %v527
    %v817 = vunpack.c.h.b16 %v527
    %v818 = vunpack.c.l.b16 %v528
    %v819 = vunpack.c.h.b16 %v528
    %v820 = vunpack.c.l.b16 %v529
    %v821 = vunpack.c.h.b16 %v529
    %v822 = vunpack.c.l.b16 %v530
    %v823 = vunpack.c.h.b16 %v530
    %v824 = vunpack.c.l.b16 %v531
    %v825 = vunpack.c.h.b16 %v531
    %v826 = vunpack.c.l.b16 %v532
    %v827 = vunpack.c.h.b16 %v532
    %v828 = vunpack.c.l.b16 %v533
    %v829 = vunpack.c.h.b16 %v533
    %v830 = vunpack.c.l.b16 %v534
    %v831 = vunpack.c.h.b16 %v534
    %v832 = vunpack.c.l.b16 %v535
    %v833 = vunpack.c.h.b16 %v535
    %v834 = vunpack.c.l.b16 %v536
    %v835 = vunpack.c.h.b16 %v536
    %v836 = vunpack.c.l.b16 %v537
    %v837 = vunpack.c.h.b16 %v537
    %v838 = vunpack.c.l.b16 %v538
    %v839 = vunpack.c.h.b16 %v538
    %v840 = vunpack.c.l.b16 %v539
    %v841 = vunpack.c.h.b16 %v539
    %v842 = vunpack.c.l.b16 %v540
    %v843 = vunpack.c.h.b16 %v540
    %v844 = vunpack.c.l.b16 %v541
    %v845 = vunpack.c.h.b16 %v541
    %v846 = vunpack.c.l.b16 %v542
    %v847 = vunpack.c.h.b16 %v542
    %v848 = vunpack.c.l.b16 %v543
    %v849 = vunpack.c.h.b16 %v543
    %v850 = vunpack.c.l.b16 %v544
    %v851 = vunpack.c.h.b16 %v544
    %v852 = vunpack.c.l.b16 %v545
    %v853 = vunpack.c.h.b16 %v545
    %v854 = vunpack.c.l.b16 %v546
    %v855 = vunpack.c.h.b16 %v546
    %v856 = vunpack.c.l.b16 %v547
    %v857 = vunpack.c.h.b16 %v547
    %v858 = vunpack.c.l.b16 %v548
    %v859 = vunpack.c.h.b16 %v548
    %v860 = vunpack.c.l.b16 %v549
    %v861 = vunpack.c.h.b16 %v549
    %v862 = vunpack.c.l.b16 %v550
    %v863 = vunpack.c.h.b16 %v550
    %v864 = vunpack.c.l.b16 %v551
    %v865 = vunpack.c.h.b16 %v551
    %v866 = vunpack.c.l.b16 %v552
    %v867 = vunpack.c.h.b16 %v552
    %v868 = vunpack.c.l.b16 %v553
    %v869 = vunpack.c.h.b16 %v553
    %v870 = vunpack.c.l.b16 %v554
    %v871 = vunpack.c.h.b16 %v554
    %v872 = vunpack.c.l.b16 %v555
    %v873 = vunpack.c.h.b16 %v555
    %v874 = vunpack.c.l.b16 %v556
    %v875 = vunpack.c.h.b16 %v556
    %v876 = vunpack.c.l.b16 %v557
    %v877 = vunpack.c.h.b16 %v557
    %v878 = vunpack.c.l.b16 %v558
    %v879 = vunpack.c.h.b16 %v558
    %v880 = vunpack.c.l.b16 %v559
    %v881 = vunpack.c.h.b16 %v559
    %v882 = vunpack.c.l.b16 %v560
    %v883 = vunpack.c.h.b16 %v560
    %v884 = vunpack.c.l.b16 %v561
    %v885 = vunpack.c.h.b16 %v561
    %v886 = vunpack.c.l.b16 %v562
    %v887 = vunpack.c.h.b16 %v562
    %v888 = vunpack.c.l.b16 %v563
    %v889 = vunpack.c.h.b16 %v563
    %v890 = vunpack.c.l.b16 %v564
    %v891 = vunpack.c.h.b16 %v564
    %v892 = vunpack.c.l.b16 %v565
    %v893 = vunpack.c.h.b16 %v565
    %v894 = vunpack.c.l.b16 %v566
    %v895 = vunpack.c.h.b16 %v566
    %v896 = vunpack.c.l.b16 %v567
    %v897 = vunpack.c.h.b16 %v567
    %v898 = vunpack.c.l.b16 %v568
    %v899 = vunpack.c.h.b16 %v568
    %v900 = vunpack.c.l.b16 %v569
    %v901 = vunpack.c.h.b16 %v569
    %v902 = vunpack.c.l.b16 %v570
    %v903 = vunpack.c.h.b16 %v570
    %v904 = vunpack.c.l.b16 %v571
    %v905 = vunpack.c.h.b16 %v571
    %v906 = vunpack.c.l.b16 %v572
    %v907 = vunpack.c.h.b16 %v572
    %v908 = vunpack.c.l.b16 %v573
    %v909 = vunpack.c.h.b16 %v573
    %v910 = vunpack.c.l.b16 %v574
    %v911 = vunpack.c.h.b16 %v574
    %v912 = vunpack.c.l.b16 %v575
    %v913 = vunpack.c.h.b16 %v575
    %v914 = vunpack.c.l.b16 %v576
    %v915 = vunpack.c.h.b16 %v576
    %v916 = vunpack.c.l.b16 %v577
    %v917 = vunpack.c.h.b16 %v577
    %v918 = vunpack.c.l.b16 %v578
    %v919 = vunpack.c.h.b16 %v578
    %v920 = vunpack.c.l.b16 %v579
    %v921 = vunpack.c.h.b16 %v579
    %v922 = vunpack.c.l.b16 %v580
    %v923 = vunpack.c.h.b16 %v580
    %v924 = vunpack.c.l.b16 %v581
    %v925 = vunpack.c.h.b16 %v581
    %v926 = vunpack.c.l.b16 %v582
    %v927 = vunpack.c.h.b16 %v582
    %v928 = vunpack.c.l.b16 %v583
    %v929 = vunpack.c.h.b16 %v583
    %v930 = vunpack.c.l.b16 %v584
    %v931 = vunpack.c.h.b16 %v584
    %v932 = vunpack.c.l.b16 %v585
    %v933 = vunpack.c.h.b16 %v585
    %v934 = vunpack.c.l.b16 %v586
    %v935 = vunpack.c.h.b16 %v586
    %v936 = vunpack.c.l.b16 %v587
    %v937 = vunpack.c.h.b16 %v587
    %v938 = vunpack.c.l.b16 %v588
    %v939 = vunpack.c.h.b16 %v588
    %v940 = vunpack.c.l.b16 %v589
    %v941 = vunpack.c.h.b16 %v589
    %v942 = vunpack.c.l.b16 %v590
    %v943 = vunpack.c.h.b16 %v590
    %v944 = vunpack.c.l.b16 %v591
    %v945 = vunpack.c.h.b16 %v591
    %v946 = vunpack.c.l.b16 %v592
    %v947 = vunpack.c.h.b16 %v592
    %v948 = vunpack.c.l.b16 %v593
    %v949 = vunpack.c.h.b16 %v593
    %v950 = vunpack.c.l.b16 %v594
    %v951 = vunpack.c.h.b16 %v594
    %v952 = vunpack.c.l.b16 %v595
    %v953 = vunpack.c.h.b16 %v595
    %v954 = vunpack.c.l.b16 %v596
    %v955 = vunpack.c.h.b16 %v596
    %v956 = vunpack.c.l.b16 %v597
    %v957 = vunpack.c.h.b16 %v597
    %v958 = vunpack.c.l.b16 %v598
    %v959 = vunpack.c.h.b16 %v598
    %v960 = vunpack.c.l.b16 %v599
    %v961 = vunpack.c.h.b16 %v599
    %v962 = vunpack.c.l.b16 %v600
    %v963 = vunpack.c.h.b16 %v600
    %v964 = vunpack.c.l.b16 %v601
    %v965 = vunpack.c.h.b16 %v601
    %v966 = vunpack.c.l.b16 %v602
    %v967 = vunpack.c.h.b16 %v602
    %v968 = vunpack.c.l.b16 %v603
    %v969 = vunpack.c.h.b16 %v603
    %v970 = vunpack.c.l.b16 %v604
    %v971 = vunpack.c.h.b16 %v604
    %v972 = vunpack.c.l.b16 %v605
    %v973 = vunpack.c.h.b16 %v605
    %v974 = vunpack.c.l.b16 %v606
    %v975 = vunpack.c.h.b16 %v606
    %v976 = vunpack.c.l.b16 %v607
    %v977 = vunpack.c.h.b16 %v607
    %v978 = vunpack.c.l.b16 %v608
    %v979 = vunpack.c.h.b16 %v608
    %v980 = vunpack.c.l.b16 %v609
    %v981 = vunpack.c.h.b16 %v609
    %v982 = vunpack.c.l.b16 %v610
    %v983 = vunpack.c.h.b16 %v610
    %v984 = vunpack.c.l.b16 %v611
    %v985 = vunpack.c.h.b16 %v611
    %v986 = vunpack.c.l.b16 %v612
    %v987 = vunpack.c.h.b16 %v612
    %v988 = vunpack.c.l.b16 %v613
    %v989 = vunpack.c.h.b16 %v613
    %v990 = vunpack.c.l.b16 %v614
    %v991 = vunpack.c.h.b16 %v614
    %v992 = vunpack.c.l.b16 %v615
    %v993 = vunpack.c.h.b16 %v615
    %v994 = vunpack.c.l.b16 %v616
    %v995 = vunpack.c.h.b16 %v616
    %v996 = vunpack.c.l.b16 %v617
    %v997 = vunpack.c.h.b16 %v617
    %v998 = vunpack.c.l.b16 %v618
    %v999 = vunpack.c.h.b16 %v618
    %v1000 = vunpack.c.l.b16 %v619
    %v1001 = vunpack.c.h.b16 %v619
    %v1002 = vunpack.c.l.b16 %v620
    %v1003 = vunpack.c.h.b16 %v620
    %v1004 = vunpack.c.l.b16 %v621
    %v1005 = vunpack.c.h.b16 %v621
    %v1006 = vunpack.c.l.b16 %v622
    %v1007 = vunpack.c.h.b16 %v622
    %v1008 = vunpack.c.l.b16 %v623
    %v1009 = vunpack.c.h.b16 %v623
    %v1010 = vunpack.c.l.b16 %v624
    %v1011 = vunpack.c.h.b16 %v624
    %v1012 = vunpack.c.l.b16 %v625
    %v1013 = vunpack.c.h.b16 %v625
    %v1014 = vunpack.c.l.b16 %v626
    %v1015 = vunpack.c.h.b16 %v626
    %v1016 = vunpack.c.l.b16 %v627
    %v1017 = vunpack.c.h.b16 %v627
    %v1018 = vunpack.c.l.b16 %v628
    %v1019 = vunpack.c.h.b16 %v628
    %v1020 = vunpack.c.l.b16 %v629
    %v1021 = vunpack.c.h.b16 %v629
    %v1022 = vunpack.c.l.b16 %v630
    %v1023 = vunpack.c.h.b16 %v630
    %v1024 = vunpack.c.l.b16 %v631
    %v1025 = vunpack.c.h.b16 %v631
    %v1026 = vunpack.c.l.b16 %v632
    %v1027 = vunpack.c.h.b16 %v632
    %v1028 = vunpack.c.l.b16 %v633
    %v1029 = vunpack.c.h.b16 %v633
    %v1030 = vunpack.c.l.b16 %v634
    %v1031 = vunpack.c.h.b16 %v634
    %v1032 = vunpack.c.l.b16 %v635
    %v1033 = vunpack.c.h.b16 %v635
    %v1034 = vunpack.c.l.b16 %v636
    %v1035 = vunpack.c.h.b16 %v636
    %v1036 = vunpack.c.l.b16 %v637
    %v1037 = vunpack.c.h.b16 %v637
    %v1038 = vunpack.c.l.b16 %v638
    %v1039 = vunpack.c.h.b16 %v638
    %v1040 = vunpack.c.l.b16 %v639
    %v1041 = vunpack.c.h.b16 %v639
    %v1042 = vunpack.c.l.b16 %v640
    %v1043 = vunpack.c.h.b16 %v640
    %v1044 = vunpack.c.l.b16 %v641
    %v1045 = vunpack.c.h.b16 %v641
    %v1046 = vunpack.c.l.b16 %v642
    %v1047 = vunpack.c.h.b16 %v642
    %v1048 = vunpack.c.l.b16 %v643
    %v1049 = vunpack.c.h.b16 %v643
    %v1050 = vpack.c.b16 %v798, %v794
    %v1051 = vpack.c.b16 %v799, %v795
    %v1052 = vpack.c.b16 %v800, %v796
    %v1053 = vpack.c.b16 %v801, %v797
    %v1054 = vpack.c.b16 %v806, %v802
    %v1055 = vpack.c.b16 %v807, %v803
    %v1056 = vpack.c.b16 %v808, %v804
    %v1057 = vpack.c.b16 %v809, %v805
    %v1058 = vpack.c.b16 %v814, %v810
    %v1059 = vpack.c.b16 %v815, %v811
    %v1060 = vpack.c.b16 %v816, %v812
    %v1061 = vpack.c.b16 %v817, %v813
    %v1062 = vpack.c.b16 %v822, %v818
    %v1063 = vpack.c.b16 %v823, %v819
    %v1064 = vpack.c.b16 %v824, %v820
    %v1065 = vpack.c.b16 %v825, %v821
    %v1066 = vpack.c.b16 %v830, %v826
    %v1067 = vpack.c.b16 %v831, %v827
    %v1068 = vpack.c.b16 %v832, %v828
    %v1069 = vpack.c.b16 %v833, %v829
    %v1070 = vpack.c.b16 %v838, %v834
    %v1071 = vpack.c.b16 %v839, %v835
    %v1072 = vpack.c.b16 %v840, %v836
    %v1073 = vpack.c.b16 %v841, %v837
    %v1074 = vpack.c.b16 %v846, %v842
    %v1075 = vpack.c.b16 %v847, %v843
    %v1076 = vpack.c.b16 %v848, %v844
    %v1077 = vpack.c.b16 %v849, %v845
    %v1078 = vpack.c.b16 %v854, %v850
    %v1079 = vpack.c.b16 %v855, %v851
    %v1080 = vpack.c.b16 %v856, %v852
    %v1081 = vpack.c.b16 %v857, %v853
    %v1082 = vpack.c.b16 %v862, %v858
    %v1083 = vpack.c.b16 %v863, %v859
    %v1084 = vpack.c.b16 %v864, %v860
    %v1085 = vpack.c.b16 %v865, %v861
    %v1086 = vpack.c.b16 %v870, %v866
    %v1087 = vpack.c.b16 %v871, %v867
    %v1088 = vpack.c.b16 %v872, %v868
    %v1089 = vpack.c.b16 %v873, %v869
    %v1090 = vpack.c.b16 %v878, %v874
    %v1091 = vpack.c.b16 %v879, %v875
    %v1092 = vpack.c.b16 %v880, %v876
    %v1093 = vpack.c.b16 %v881, %v877
    %v1094 = vpack.c.b16 %v886, %v882
    %v1095 = vpack.c.b16 %v887, %v883
    %v1096 = vpack.c.b16 %v888, %v884
    %v1097 = vpack.c.b16 %v889, %v885
    %v1098 = vpack.c.b16 %v894, %v890
    %v1099 = vpack.c.b16 %v895, %v891
    %v1100 = vpack.c.b16 %v896, %v892
    %v1101 = vpack.c.b16 %v897, %v893
    %v1102 = vpack.c.b16 %v902, %v898
    %v1103 = vpack.c.b16 %v903, %v899
    %v1104 = vpack.c.b16 %v904, %v900
    %v1105 = vpack.c.b16 %v905, %v901
    %v1106 = vpack.c.b16 %v910, %v906
    %v1107 = vpack.c.b16 %v911, %v907
    %v1108 = vpack.c.b16 %v912, %v908
    %v1109 = vpack.c.b16 %v913, %v909
    %v1110 = vpack.c.b16 %v918, %v914
    %v1111 = vpack.c.b16 %v919, %v915
    %v1112 = vpack.c.b16 %v920, %v916
    %v1113 = vpack.c.b16 %v921, %v917
    %v1114 = vpack.c.b16 %v926, %v922
    %v1115 = vpack.c.b16 %v927, %v923
    %v1116 = vpack.c.b16 %v928, %v924
    %v1117 = vpack.c.b16 %v929, %v925
    %v1118 = vpack.c.b16 %v934, %v930
    %v1119 = vpack.c.b16 %v935, %v931
    %v1120 = vpack.c.b16 %v936, %v932
    %v1121 = vpack.c.b16 %v937, %v933
    %v1122 = vpack.c.b16 %v942, %v938
    %v1123 = vpack.c.b16 %v943, %v939
    %v1124 = vpack.c.b16 %v944, %v940
    %v1125 = vpack.c.b16 %v945, %v941
    %v1126 = vpack.c.b16 %v950, %v946
    %v1127 = vpack.c.b16 %v951, %v947
    %v1128 = vpack.c.b16 %v952, %v948
    %v1129 = vpack.c.b16 %v953, %v949
    %v1130 = vpack.c.b16 %v958, %v954
    %v1131 = vpack.c.b16 %v959, %v955
    %v1132 = vpack.c.b16 %v960, %v956
    %v1133 = vpack.c.b16 %v961, %v957
    %v1134 = vpack.c.b16 %v966, %v962
    %v1135 = vpack.c.b16 %v967, %v963
    %v1136 = vpack.c.b16 %v968, %v964
    %v1137 = vpack.c.b16 %v969, %v965
    %v1138 = vpack.c.b16 %v974, %v970
    %v1139 = vpack.c.b16 %v975, %v971
    %v1140 = vpack.c.b16 %v976, %v972
    %v1141 = vpack.c.b16 %v977, %v973
    %v1142 = vpack.c.b16 %v982, %v978
    %v1143 = vpack.c.b16 %v983, %v979
    %v1144 = vpack.c.b16 %v984, %v980
    %v1145 = vpack.c.b16 %v985, %v981
    %v1146 = vpack.c.b16 %v990, %v986
    %v1147 = vpack.c.b16 %v991, %v987
    %v1148 = vpack.c.b16 %v992, %v988
    %v1149 = vpack.c.b16 %v993, %v989
    %v1150 = vpack.c.b16 %v998, %v994
    %v1151 = vpack.c.b16 %v999, %v995
    %v1152 = vpack.c.b16 %v1000, %v996
    %v1153 = vpack.c.b16 %v1001, %v997
    %v1154 = vpack.c.b16 %v1006, %v1002
    %v1155 = vpack.c.b16 %v1007, %v1003
    %v1156 = vpack.c.b16 %v1008, %v1004
    %v1157 = vpack.c.b16 %v1009, %v1005
    %v1158 = vpack.c.b16 %v1014, %v1010
    %v1159 = vpack.c.b16 %v1015, %v1011
    %v1160 = vpack.c.b16 %v1016, %v1012
    %v1161 = vpack.c.b16 %v1017, %v1013
    %v1162 = vpack.c.b16 %v1022, %v1018
    %v1163 = vpack.c.b16 %v1023, %v1019
    %v1164 = vpack.c.b16 %v1024, %v1020
    %v1165 = vpack.c.b16 %v1025, %v1021
    %v1166 = vpack.c.b16 %v1030, %v1026
    %v1167 = vpack.c.b16 %v1031, %v1027
    %v1168 = vpack.c.b16 %v1032, %v1028
    %v1169 = vpack.c.b16 %v1033, %v1029
    %v1170 = vpack.c.b16 %v1038, %v1034
    %v1171 = vpack.c.b16 %v1039, %v1035
    %v1172 = vpack.c.b16 %v1040, %v1036
    %v1173 = vpack.c.b16 %v1041, %v1037
    %v1174 = vpack.c.b16 %v1046, %v1042
    %v1175 = vpack.c.b16 %v1047, %v1043
    %v1176 = vpack.c.b16 %v1048, %v1044
    %v1177 = vpack.c.b16 %v1049, %v1045
    %1306 = vmatprep.subr.bf16.mxu0 %v1051
    %1307 = vmatpush1.bf16.msra.mxu0 %v1050
    %1308 = vmatprep.subr.bf16.mxu0 %v1055
    %1309 = vmatpush1.bf16.msra.mxu0 %v1054
    %1310 = vmatprep.subr.bf16.mxu0 %v1059
    %1311 = vmatpush1.bf16.msra.mxu0 %v1058
    %1312 = vmatprep.subr.bf16.mxu0 %v1063
    %1313 = vmatpush1.bf16.msra.mxu0 %v1062
    %1314 = vmatprep.subr.bf16.mxu0 %v1067
    %1315 = vmatpush1.bf16.msra.mxu0 %v1066
    %1316 = vmatprep.subr.bf16.mxu0 %v1071
    %1317 = vmatpush1.bf16.msra.mxu0 %v1070
    %1318 = vmatprep.subr.bf16.mxu0 %v1075
    %1319 = vmatpush1.bf16.msra.mxu0 %v1074
    %1320 = vmatprep.subr.bf16.mxu0 %v1079
    %1321 = vmatpush1.bf16.msra.mxu0 %v1078
    %1322 = vmatprep.subr.bf16.mxu0 %v1083
    %1323 = vmatpush1.bf16.msra.mxu0 %v1082
    %1324 = vmatprep.subr.bf16.mxu0 %v1087
    %1325 = vmatpush1.bf16.msra.mxu0 %v1086
    %1326 = vmatprep.subr.bf16.mxu0 %v1091
    %1327 = vmatpush1.bf16.msra.mxu0 %v1090
    %1328 = vmatprep.subr.bf16.mxu0 %v1095
    %1329 = vmatpush1.bf16.msra.mxu0 %v1094
    %1330 = vmatprep.subr.bf16.mxu0 %v1099
    %1331 = vmatpush1.bf16.msra.mxu0 %v1098
    %1332 = vmatprep.subr.bf16.mxu0 %v1103
    %1333 = vmatpush1.bf16.msra.mxu0 %v1102
    %1334 = vmatprep.subr.bf16.mxu0 %v1107
    %1335 = vmatpush1.bf16.msra.mxu0 %v1106
    %1336 = vmatprep.subr.bf16.mxu0 %v1111
    %1337 = vmatpush1.bf16.msra.mxu0 %v1110
    %1338 = vmatprep.mubr.bf16.mxu0 %v513
    %1339 = vmatmul.mubr.bf16.gmra.mrb[0].mxu0 %v512
    %v1340 = vpop.f32.mrb[0].mxu0
    %v1341 = vadd.f32 %v649, %v1340
    %v1342 = vpop.f32.mrb[0].mxu0
    %v1343 = vadd.f32 %v653, %v1342
    %v1344 = vpop.f32.mrb[0].mxu0
    %v1345 = vpop.f32.mrb[0].mxu0
    %1346 = vdwg.mxu0
    %1347 = vmatprep.subr.bf16.mxu0 %v1115
    %1348 = vmatpush1.bf16.msra.mxu0 %v1114
    %1349 = vmatprep.subr.bf16.mxu0 %v1119
    %1350 = vmatpush1.bf16.msra.mxu0 %v1118
    %1351 = vmatprep.subr.bf16.mxu0 %v1123
    %1352 = vmatpush1.bf16.msra.mxu0 %v1122
    %1353 = vmatprep.subr.bf16.mxu0 %v1127
    %1354 = vmatpush1.bf16.msra.mxu0 %v1126
    %1355 = vmatprep.subr.bf16.mxu0 %v1131
    %1356 = vmatpush1.bf16.msra.mxu0 %v1130
    %1357 = vmatprep.subr.bf16.mxu0 %v1135
    %1358 = vmatpush1.bf16.msra.mxu0 %v1134
    %1359 = vmatprep.subr.bf16.mxu0 %v1139
    %1360 = vmatpush1.bf16.msra.mxu0 %v1138
    %1361 = vmatprep.subr.bf16.mxu0 %v1143
    %1362 = vmatpush1.bf16.msra.mxu0 %v1142
    %1363 = vmatprep.subr.bf16.mxu0 %v1147
    %1364 = vmatpush1.bf16.msra.mxu0 %v1146
    %1365 = vmatprep.subr.bf16.mxu0 %v1151
    %1366 = vmatpush1.bf16.msra.mxu0 %v1150
    %1367 = vmatprep.subr.bf16.mxu0 %v1155
    %1368 = vmatpush1.bf16.msra.mxu0 %v1154
    %1369 = vmatprep.subr.bf16.mxu0 %v1159
    %1370 = vmatpush1.bf16.msra.mxu0 %v1158
    %1371 = vmatprep.subr.bf16.mxu0 %v1163
    %1372 = vmatpush1.bf16.msra.mxu0 %v1162
    %1373 = vmatprep.subr.bf16.mxu0 %v1167
    %1374 = vmatpush1.bf16.msra.mxu0 %v1166
    %1375 = vmatprep.subr.bf16.mxu0 %v1171
    %1376 = vmatpush1.bf16.msra.mxu0 %v1170
    %1377 = vmatprep.subr.bf16.mxu0 %v1175
    %1378 = vmatpush1.bf16.msra.mxu0 %v1174
    %1379 = vmatprep.mubr.bf16.mxu0 %v515
    %1380 = vmatmul.mubr.bf16.gmra.mrb[0].mxu0 %v514
    %v1381 = vpop.f32.mrb[0].mxu0
    %v1382 = vadd.f32 %v1341, %v1381
    %v1383 = vpop.f32.mrb[0].mxu0
    %v1384 = vadd.f32 %v1343, %v1383
    %v1385 = vpop.f32.mrb[0].mxu0
    %v1386 = vpop.f32.mrb[0].mxu0
    %1387 = vdwg.mxu0
    %1388 = vmatprep.subr.bf16.mxu0 %v1053
    %1389 = vmatpush1.bf16.msra.mxu0 %v1052
    %1390 = vmatprep.subr.bf16.mxu0 %v1057
    %1391 = vmatpush1.bf16.msra.mxu0 %v1056
    %1392 = vmatprep.subr.bf16.mxu0 %v1061
    %1393 = vmatpush1.bf16.msra.mxu0 %v1060
    %1394 = vmatprep.subr.bf16.mxu0 %v1065
    %1395 = vmatpush1.bf16.msra.mxu0 %v1064
    %1396 = vmatprep.subr.bf16.mxu0 %v1069
    %1397 = vmatpush1.bf16.msra.mxu0 %v1068
    %1398 = vmatprep.subr.bf16.mxu0 %v1073
    %1399 = vmatpush1.bf16.msra.mxu0 %v1072
    %1400 = vmatprep.subr.bf16.mxu0 %v1077
    %1401 = vmatpush1.bf16.msra.mxu0 %v1076
    %1402 = vmatprep.subr.bf16.mxu0 %v1081
    %1403 = vmatpush1.bf16.msra.mxu0 %v1080
    %1404 = vmatprep.subr.bf16.mxu0 %v1085
    %1405 = vmatpush1.bf16.msra.mxu0 %v1084
    %1406 = vmatprep.subr.bf16.mxu0 %v1089
    %1407 = vmatpush1.bf16.msra.mxu0 %v1088
    %1408 = vmatprep.subr.bf16.mxu0 %v1093
    %1409 = vmatpush1.bf16.msra.mxu0 %v1092
    %1410 = vmatprep.subr.bf16.mxu0 %v1097
    %1411 = vmatpush1.bf16.msra.mxu0 %v1096
    %1412 = vmatprep.subr.bf16.mxu0 %v1101
    %1413 = vmatpush1.bf16.msra.mxu0 %v1100
    %1414 = vmatprep.subr.bf16.mxu0 %v1105
    %1415 = vmatpush1.bf16.msra.mxu0 %v1104
    %1416 = vmatprep.subr.bf16.mxu0 %v1109
    %1417 = vmatpush1.bf16.msra.mxu0 %v1108
    %1418 = vmatprep.subr.bf16.mxu0 %v1113
    %1419 = vmatpush1.bf16.msra.mxu0 %v1112
    %1420 = vmatprep.mubr.bf16.mxu0 %v513
    %1421 = vmatmul.mubr.bf16.gmra.mrb[0].mxu0 %v512
    %v1422 = vpop.f32.mrb[0].mxu0
    %v1423 = vadd.f32 %v657, %v1422
    %v1424 = vpop.f32.mrb[0].mxu0
    %v1425 = vadd.f32 %v661, %v1424
    %v1426 = vpop.f32.mrb[0].mxu0
    %v1427 = vpop.f32.mrb[0].mxu0
    %1428 = vdwg.mxu0
    %1429 = vmatprep.subr.bf16.mxu0 %v1117
    %1430 = vmatpush1.bf16.msra.mxu0 %v1116
    %1431 = vmatprep.subr.bf16.mxu0 %v1121
    %1432 = vmatpush1.bf16.msra.mxu0 %v1120
    %1433 = vmatprep.subr.bf16.mxu0 %v1125
    %1434 = vmatpush1.bf16.msra.mxu0 %v1124
    %1435 = vmatprep.subr.bf16.mxu0 %v1129
    %1436 = vmatpush1.bf16.msra.mxu0 %v1128
    %1437 = vmatprep.subr.bf16.mxu0 %v1133
    %1438 = vmatpush1.bf16.msra.mxu0 %v1132
    %1439 = vmatprep.subr.bf16.mxu0 %v1137
    %1440 = vmatpush1.bf16.msra.mxu0 %v1136
    %1441 = vmatprep.subr.bf16.mxu0 %v1141
    %1442 = vmatpush1.bf16.msra.mxu0 %v1140
    %1443 = vmatprep.subr.bf16.mxu0 %v1145
    %1444 = vmatpush1.bf16.msra.mxu0 %v1144
    %1445 = vmatprep.subr.bf16.mxu0 %v1149
    %1446 = vmatpush1.bf16.msra.mxu0 %v1148
    %1447 = vmatprep.subr.bf16.mxu0 %v1153
    %1448 = vmatpush1.bf16.msra.mxu0 %v1152
    %1449 = vmatprep.subr.bf16.mxu0 %v1157
    %1450 = vmatpush1.bf16.msra.mxu0 %v1156
    %1451 = vmatprep.subr.bf16.mxu0 %v1161
    %1452 = vmatpush1.bf16.msra.mxu0 %v1160
    %1453 = vmatprep.subr.bf16.mxu0 %v1165
    %1454 = vmatpush1.bf16.msra.mxu0 %v1164
    %1455 = vmatprep.subr.bf16.mxu0 %v1169
    %1456 = vmatpush1.bf16.msra.mxu0 %v1168
    %1457 = vmatprep.subr.bf16.mxu0 %v1173
    %1458 = vmatpush1.bf16.msra.mxu0 %v1172
    %1459 = vmatprep.subr.bf16.mxu0 %v1177
    %1460 = vmatpush1.bf16.msra.mxu0 %v1176
    %1461 = vmatprep.mubr.bf16.mxu0 %v515
    %1462 = vmatmul.mubr.bf16.gmra.mrb[0].mxu0 %v514
    %v1463 = vpop.f32.mrb[0].mxu0
    %v1464 = vadd.f32 %v1423, %v1463
    %v1465 = vpop.f32.mrb[0].mxu0
    %v1466 = vadd.f32 %v1425, %v1465
    %v1467 = vpop.f32.mrb[0].mxu0
    %v1468 = vpop.f32.mrb[0].mxu0
    %1469 = vdwg.mxu0
    %v1470 = vpack.c.bf16 %v1382, %v1382
    %v1471 = vpack.c.bf16 %v1384, %v1384
    %v1472 = vpack.c.bf16 %v1464, %v1464
    %v1473 = vpack.c.bf16 %v1466, %v1466
    %v1474 = vxor.u32 %v1470, 2147516416
    %v1475 = vxor.u32 %v1471, 2147516416
    %v1476 = vxor.u32 %v1472, 2147516416
    %v1477 = vxor.u32 %v1473, 2147516416
    %v1479 = vmul.bf16 %v1474, 1069105081
    %v1480 = vpow.bf16.pop %v1479
    %v1482 = vmul.bf16 %v1475, 1069105081
    %v1483 = vpow.bf16.pop %v1482
    %v1485 = vmul.bf16 %v1476, 1069105081
    %v1486 = vpow.bf16.pop %v1485
    %v1488 = vmul.bf16 %v1477, 1069105081
    %v1489 = vpow.bf16.pop %v1488
    %v1490 = vadd.bf16 %v1480, 1065369472
    %v1491 = vadd.bf16 %v1483, 1065369472
    %v1492 = vadd.bf16 %v1486, 1065369472
    %v1493 = vadd.bf16 %v1489, 1065369472
    %v1494 = vrcp.bf16.pop %v1490
    %v1495 = vmul.bf16 1065369472, %v1494
    %v1496 = vrcp.bf16.pop %v1491
    %v1497 = vmul.bf16 1065369472, %v1496
    %v1498 = vrcp.bf16.pop %v1492
    %v1499 = vmul.bf16 1065369472, %v1498
    %v1500 = vrcp.bf16.pop %v1493
    %v1501 = vmul.bf16 1065369472, %v1500
    %v1502 = vmul.bf16 %v1470, %v1495
    %v1503 = vmul.bf16 %v1471, %v1497
    %v1504 = vmul.bf16 %v1472, %v1499
    %v1505 = vmul.bf16 %v1473, %v1501
    %v1510 = vunpack.c.l.b16 %v1502
    %v1511 = vunpack.c.l.b16 %v1503
    %v1512 = vunpack.c.l.b16 %v1504
    %v1513 = vunpack.c.l.b16 %v1505
    %v1514 = vpack.c.b16 %v1511, %v1510
    %v1515 = vpack.c.b16 %v1513, %v1512
    %1518 = vst [vmem:[#allocation7] sm:$0xff] %v1514
    %1519 = vst [vmem:[#allocation7 + $0x8] sm:$0xff] %v1515
    // Predicated region
    $region38: #{_time_embedding_impl.1} parent=1 // pred_check
      _
    $region39: #{_time_embedding_impl.1} parent=1 // pred_check_branch
      %1521 = sbr.rel (0) target = $region41
    $region40: #{_time_embedding_impl.1} parent=1 // pred_region
      %s1523 = ssub.s32 256, 256
      %1524 = vsyncadd [#allocation4], %s1523
      %s1526 = sshll.u32 [#allocation7], 4
      %s1527 = int_to_ptr.vmem [resolvable:$true] %s1526
      %1529 = dma.vmem_to_hbm [thread:$0]  %s1527, 256, %s7, [#allocation4]
    $region41: #{_time_embedding_impl.1} parent=1 // pred_fallthru
      _
    // Predicated region
    $region42: #{_time_embedding_impl.1} parent=1 // pred_check
      _
    $region43: #{_time_embedding_impl.1} parent=1 // pred_check_branch
      %1531 = sbr.rel (0) target = $region45
    $region44: #{_time_embedding_impl.1} parent=1 // pred_region
      %1532 = dma.done [#allocation4], 256
    $region45: #{_time_embedding_impl.1} parent=1 // pred_fallthru
      _
    %1533 = vsyncpa [#allocation3], 1
    %1534 = vsyncpa [#allocation6], 1
    %1535 = vsyncpa [#allocation4], 1

</llo_original>
